<compile_context>
chip_gen: v5e
topology: v5e:2x2
jax: 0.10.0
libtpu: 0.0.40
codegen_flags: <defaults>
</compile_context>

<pallas_src>
import jax
import jax.numpy as jnp
from jax.experimental import pallas as pl
from jax.experimental.pallas import tpu as pltpu

LANE = 128


def _round_up(n, m):
    return ((n + m - 1) // m) * m


def _mm(a, b, prec):
    # 2-D matmul on the MXU with f32 accumulation.
    return jax.lax.dot_general(
        a, b, (((1,), (0,)), ((), ())),
        precision=prec, preferred_element_type=jnp.float32)


def digitnet_kernel(x_ref, w1_ref, b1_ref, w2_ref, b2_ref, out_ref):
    wdt = w1_ref.dtype
    # f32 weights -> HIGHEST precision (multi-pass MXU, matches f32 reference);
    # bf16 weights -> native bf16 MXU path.  f32 accumulate either way.
    prec = jax.lax.Precision.HIGHEST if wdt == jnp.float32 else None
    # In-register cast at the MXU input (x is read from HBM once, in its own
    # dtype; no wrapper-side cast pass).  Note: on the bf16 path this also
    # quantizes the input activations, not just the weights.
    x = x_ref[...].astype(wdt)
    h = _mm(x, w1_ref[...], prec)
    h = jnp.maximum(h + b1_ref[...], 0.0)          # bias + ReLU in f32 on the VPU
    o = _mm(h.astype(wdt), w2_ref[...], prec)
    out_ref[...] = (o + b2_ref[...]).astype(out_ref.dtype)   # lane-dense store


def prepare_params(w1_t, b1, w2_t, b2, *, dtype=jnp.float32):
    """Pad/transpose PyTorch-layout parameters once (not per call).

    w1_t: (H, D_in)  b1: (H,)  w2_t: (O, H)  b2: (O,)  (torch nn.Linear layout)
    Returns weights stored as (in, out) with H and O zero-padded to 128, and
    f32 biases padded with zeros (so padded ReLU columns are exactly 0).
    dtype=jnp.bfloat16 halves weight/activation HBM bytes on all generations
    (v5e's MXU takes bf16 natively); accumulation stays f32 in the kernel.
    """
    H, D_in = w1_t.shape
    O = w2_t.shape[0]
    HP = _round_up(H, LANE)
    OP = _round_up(O, LANE)
    w1 = jnp.zeros((D_in, HP), dtype).at[:, :H].set(w1_t.T.astype(dtype))
    b1p = jnp.zeros((1, HP), jnp.float32).at[0, :H].set(b1.astype(jnp.float32))
    w2 = jnp.zeros((HP, OP), dtype).at[:H, :O].set(w2_t.T.astype(dtype))
    b2p = jnp.zeros((1, OP), jnp.float32).at[0, :O].set(b2.astype(jnp.float32))
    return (w1, b1p, w2, b2p, O)


def digitnet_forward(x, params, *, block_b=2048, out_dtype=None,
                     vmem_limit_bytes=None):
    """x: (B, 64) float array (f32 or bf16). params: output of prepare_params.

    out_dtype=jnp.bfloat16 halves the padded-output writeback (the largest HBM
    stream) at the cost of output precision only.
    """
    w1, b1, w2, b2, O = params
    B, D_in = x.shape
    HP = w1.shape[1]
    OP = w2.shape[1]
    out_dtype = x.dtype if out_dtype is None else out_dtype
    out_itemsize = jnp.dtype(out_dtype).itemsize

    # Batch tiling: rows per step are a multiple of the sublane packing (8 for
    # f32, 16 for bf16).  Target >= 4 grid steps for large batches (megacore +
    # pipeline overlap) but never shrink tiles below ~256 rows (per-step
    # overhead amortization); cap at block_b.
    row_mult = 16 if x.dtype == jnp.bfloat16 else 8
    min_tile = 256
    steps = max(pl.cdiv(B, block_b), min(4, max(1, B // min_tile)))
    TB = min(block_b, _round_up(pl.cdiv(B, steps), row_mult))
    grid = (pl.cdiv(B, TB),)   # ragged last block handled by Pallas (no jnp.pad)

    # Scoped-VMEM estimate (double-buffered streamed blocks + resident params);
    # only raise the limit when a huge tile would brush v5e's 16 MiB default.
    est = (2 * TB * D_in * x.dtype.itemsize
           + 2 * TB * OP * out_itemsize
           + w1.size * w1.dtype.itemsize + w2.size * w2.dtype.itemsize
           + (b1.size + b2.size) * 4)
    if vmem_limit_bytes is None and est > 12 * 1024 * 1024:
        vmem_limit_bytes = min(int(2 * est), 100 * 1024 * 1024)

    cost = pl.CostEstimate(
        flops=2 * B * (D_in * HP + HP * OP),
        transcendentals=0,
        bytes_accessed=(x.size * x.dtype.itemsize
                        + w1.size * w1.dtype.itemsize
                        + w2.size * w2.dtype.itemsize
                        + b1.size * b1.dtype.itemsize
                        + b2.size * b2.dtype.itemsize
                        + B * OP * out_itemsize),
    )

    out = pl.pallas_call(
        digitnet_kernel,
        out_shape=jax.ShapeDtypeStruct((B, OP), out_dtype),
        grid=grid,
        in_specs=[
            pl.BlockSpec((TB, D_in), lambda i: (i, 0)),   # x: streamed over batch
            pl.BlockSpec((D_in, HP), lambda i: (0, 0)),   # W1: resident
            pl.BlockSpec((1, HP), lambda i: (0, 0)),      # b1: resident
            pl.BlockSpec((HP, OP), lambda i: (0, 0)),     # W2: resident
            pl.BlockSpec((1, OP), lambda i: (0, 0)),      # b2: resident
        ],
        out_specs=pl.BlockSpec((TB, OP), lambda i: (i, 0)),  # lane-dense (128)
        compiler_params=pltpu.CompilerParams(
            dimension_semantics=("parallel",),              # megacore on v7x
            vmem_limit_bytes=vmem_limit_bytes),
        cost_estimate=cost,
    )(x, w1, b1, w2, b2)

    return out[:B, :O]


if __name__ == "__main__":
    # Small shapes consistent with DigitNet: Linear(64, 32) -> ReLU -> Linear(32, 10)
    batch, d_in, hidden, out_dim = 8, 64, 32, 10

    key = jax.random.PRNGKey(0)
    kx, k1, k2, k3, k4 = jax.random.split(key, 5)

    x = jax.random.normal(kx, (batch, d_in), dtype=jnp.float32)
    # Parameters in PyTorch nn.Linear layout: weight (out, in), bias (out,)
    w1_t = jax.random.normal(k1, (hidden, d_in), dtype=jnp.float32) * 0.1
    b1 = jax.random.normal(k2, (hidden,), dtype=jnp.float32) * 0.1
    w2_t = jax.random.normal(k3, (out_dim, hidden), dtype=jnp.float32) * 0.1
    b2 = jax.random.normal(k4, (out_dim,), dtype=jnp.float32) * 0.1

    # Reference (same math as the PyTorch forward), plain JAX, f32.
    ref = jnp.maximum(x @ w1_t.T + b1, 0.0) @ w2_t.T + b2

    # f32 path: HIGHEST-precision MXU, exact vs reference.
    params_f32 = prepare_params(w1_t, b1, w2_t, b2, dtype=jnp.float32)
    out = jax.block_until_ready(digitnet_forward(x, params_f32))
    assert out.shape == (batch, out_dim)
    assert jnp.allclose(out, ref, atol=1e-5, rtol=1e-5)

    # bf16 weights/activations + bf16 output store (mem-bound fast path on all
    # generations): f32 accumulate, looser tolerance.
    params_bf16 = prepare_params(w1_t, b1, w2_t, b2, dtype=jnp.bfloat16)
    out_bf16 = jax.block_until_ready(
        digitnet_forward(x, params_bf16, out_dtype=jnp.bfloat16))
    assert out_bf16.shape == (batch, out_dim)
    assert jnp.allclose(out_bf16.astype(jnp.float32), ref, atol=1e-1, rtol=1e-1)

    print("KERNEL_OK")
</pallas_src>

<mosaic_0001>
module attributes {stable_mosaic.version = 11 : i64} {
  func.func @digitnet_kernel(%arg0: i32, %arg1: memref<8x64xf32, #tpu.memory_space<vmem>>, %arg2: memref<64x128xf32, #tpu.memory_space<vmem>>, %arg3: memref<1x128xf32, #tpu.memory_space<vmem>>, %arg4: memref<128x128xf32, #tpu.memory_space<vmem>>, %arg5: memref<1x128xf32, #tpu.memory_space<vmem>>, %arg6: memref<8x128xf32, #tpu.memory_space<vmem>>) attributes {dimension_semantics = [#tpu.dimension_semantics<parallel>], iteration_bounds = array<i64: 1>, scalar_prefetch = 0 : i64, scratch_operands = 0 : i64, tpu.core_type = #tpu.core_type<tc>, window_params = [{transform_indices = @transform_0, window_bounds = array<i64: 8, 64>}, {pipeline_mode = #tpu.pipeline_mode<synchronous>, transform_indices = @transform_1, window_bounds = array<i64: 64, 128>}, {pipeline_mode = #tpu.pipeline_mode<synchronous>, transform_indices = @transform_2, window_bounds = array<i64: 1, 128>}, {pipeline_mode = #tpu.pipeline_mode<synchronous>, transform_indices = @transform_3, window_bounds = array<i64: 128, 128>}, {pipeline_mode = #tpu.pipeline_mode<synchronous>, transform_indices = @transform_4, window_bounds = array<i64: 1, 128>}, {transform_indices = @transform_5, window_bounds = array<i64: 8, 128>}]} {
    %c0 = arith.constant 0 : index
    %c0_0 = arith.constant 0 : index
    %0 = vector.load %arg1[%c0, %c0_0] : memref<8x64xf32, #tpu.memory_space<vmem>>, vector<8x64xf32>
    %c0_1 = arith.constant 0 : index
    %c0_2 = arith.constant 0 : index
    %1 = vector.load %arg2[%c0_1, %c0_2] : memref<64x128xf32, #tpu.memory_space<vmem>>, vector<64x128xf32>
    %cst = arith.constant dense<0.000000e+00> : vector<8x128xf32>
    %2 = tpu.matmul %0, %1, %cst {dimension_numbers = #tpu.dot_dimension_numbers<[1], [0], [0], [1], [0, 0, 1, 1], [], []>, precision = #tpu.contract_precision<fp32>} : vector<8x64xf32>, vector<64x128xf32>, vector<8x128xf32> -> vector<8x128xf32>
    %c0_3 = arith.constant 0 : index
    %c0_4 = arith.constant 0 : index
    %3 = vector.load %arg3[%c0_3, %c0_4] : memref<1x128xf32, #tpu.memory_space<vmem>>, vector<1x128xf32>
    %4 = vector.broadcast %3 : vector<1x128xf32> to vector<8x128xf32>
    %5 = arith.addf %2, %4 : vector<8x128xf32>
    %cst_5 = arith.constant 0.000000e+00 : f32
    %6 = vector.broadcast %cst_5 : f32 to vector<8x128xf32>
    %7 = arith.maximumf %5, %6 : vector<8x128xf32>
    %c0_6 = arith.constant 0 : index
    %c0_7 = arith.constant 0 : index
    %8 = vector.load %arg4[%c0_6, %c0_7] : memref<128x128xf32, #tpu.memory_space<vmem>>, vector<128x128xf32>
    %cst_8 = arith.constant dense<0.000000e+00> : vector<8x128xf32>
    %9 = tpu.matmul %7, %8, %cst_8 {dimension_numbers = #tpu.dot_dimension_numbers<[1], [0], [0], [1], [0, 0, 1, 1], [], []>, precision = #tpu.contract_precision<fp32>} : vector<8x128xf32>, vector<128x128xf32>, vector<8x128xf32> -> vector<8x128xf32>
    %c0_9 = arith.constant 0 : index
    %c0_10 = arith.constant 0 : index
    %10 = vector.load %arg5[%c0_9, %c0_10] : memref<1x128xf32, #tpu.memory_space<vmem>>, vector<1x128xf32>
    %11 = vector.broadcast %10 : vector<1x128xf32> to vector<8x128xf32>
    %12 = arith.addf %9, %11 : vector<8x128xf32>
    %c0_11 = arith.constant 0 : index
    %c0_12 = arith.constant 0 : index
    %13 = vector.load %arg6[%c0_11, %c0_12] : memref<8x128xf32, #tpu.memory_space<vmem>>, vector<8x128xf32>
    tpu.vector_store %arg6[%c0_11, %c0_12], %12 {strides = array<i32>} : memref<8x128xf32, #tpu.memory_space<vmem>>, vector<8x128xf32>,
    return
  }
  func.func @transform_0(%arg0: i32) -> (i32, i32) {
    %c0_i32 = arith.constant 0 : i32
    %c0_i32_0 = arith.constant 0 : i32
    return %arg0, %c0_i32 : i32, i32
  }
  func.func @transform_1(%arg0: i32) -> (i32, i32) {
    %c0_i32 = arith.constant 0 : i32
    %c0_i32_0 = arith.constant 0 : i32
    %c0_i32_1 = arith.constant 0 : i32
    return %c0_i32, %c0_i32_0 : i32, i32
  }
  func.func @transform_2(%arg0: i32) -> (i32, i32) {
    %c0_i32 = arith.constant 0 : i32
    %c0_i32_0 = arith.constant 0 : i32
    %c0_i32_1 = arith.constant 0 : i32
    return %c0_i32, %c0_i32_0 : i32, i32
  }
  func.func @transform_3(%arg0: i32) -> (i32, i32) {
    %c0_i32 = arith.constant 0 : i32
    %c0_i32_0 = arith.constant 0 : i32
    %c0_i32_1 = arith.constant 0 : i32
    return %c0_i32, %c0_i32_0 : i32, i32
  }
  func.func @transform_4(%arg0: i32) -> (i32, i32) {
    %c0_i32 = arith.constant 0 : i32
    %c0_i32_0 = arith.constant 0 : i32
    %c0_i32_1 = arith.constant 0 : i32
    return %c0_i32, %c0_i32_0 : i32, i32
  }
  func.func @transform_5(%arg0: i32) -> (i32, i32) {
    %c0_i32 = arith.constant 0 : i32
    %c0_i32_0 = arith.constant 0 : i32
    return %arg0, %c0_i32 : i32, i32
  }
}

</mosaic_0001>

<llo_original>
// kernel: tpu_custom_call.1
$region0: #{tpu_custom_call.1}
  #allocation0 [shape = 'u32[]', space=smem, size = 0x4, offset = 0x4, fixed_abs, tag = 'smem constant byte address 0x4 - core index']
  #allocation1 [shape = 'u32[72,128]{1,0:T(1,128)}', space=vmem, size = 0x9000, scoped, tag = 'internal scratch']
  %s0 = inlined_call_operand.hbm [shape: f32[8,64], index: 0, kind: input, shape index: {}]
  %s1 = inlined_call_operand.hbm [shape: f32[64,128], index: 1, kind: input, shape index: {}]
  %s2 = inlined_call_operand.vmem [shape: f32[1,128], index: 2, kind: input, shape index: {}]
  %s3 = inlined_call_operand.hbm [shape: f32[128,128], index: 3, kind: input, shape index: {}]
  %s4 = inlined_call_operand.vmem [shape: f32[1,128], index: 4, kind: input, shape index: {}]
  %s5 = inlined_call_operand.hbm [shape: f32[8,128], index: 5, kind: output, shape index: {}]
  %s6 = sld [smem:[#allocation0]]
  $region42: #{tpu_custom_call.1} parent=0
    _
  %s8 = ssub.s32 1, %s6
  %s9 = scalar_select 0, %s8, %s6
  $region1: #{tpu_custom_call.1} parent=0
    #allocation2 [shape = 'u8[4096]{0}', space=vmem, size = 0x1000, scoped, tag = 'input window, operand 0, single buffered']
    #allocation3 [shape = 's32[1]{0}', space=sflag, size = 0x4, scoped, tag = 'scoped memory for tpu_custom_call.1']
    #allocation4 [shape = 's32[1]{0}', space=sflag, size = 0x4, scoped, tag = 'scoped memory for tpu_custom_call.1']
    #allocation5 [shape = 'u8[32768]{0}', space=vmem, size = 0x8000, scoped, tag = 'input window, operand 1, single buffered']
    #allocation6 [shape = 's32[1]{0}', space=sflag, size = 0x4, scoped, tag = 'scoped memory for tpu_custom_call.1']
    #allocation7 [shape = 'u8[65536]{0}', space=vmem, size = 0x10000, scoped, tag = 'input window, operand 3, single buffered']
    #allocation8 [shape = 'u8[4096]{0}', space=vmem, size = 0x1000, scoped, tag = 'output window, operand 0, single buffered']
    %10 = vsyncpa [#allocation3], 0
    %11 = vsyncpa [#allocation6], 0
    %12 = vsyncpa [#allocation4], 0
    // Predicated region
    $region2: #{tpu_custom_call.1} parent=1 // pred_check
      _
    $region3: #{tpu_custom_call.1} parent=1 // pred_check_branch
      %14 = sbr.rel (0) target = $region5
    $region4: #{tpu_custom_call.1} parent=1 // pred_region
      %16 = vsyncadd [#allocation3], 0
      %s18 = sshll.u32 %s0, 4
      %s19 = int_to_ptr.hbm [resolvable:$true] %s18
      %s20 = sshll.u32 [#allocation2], 4
      %s21 = int_to_ptr.vmem [resolvable:$true] %s20
      %23 = dma.hbm_to_vmem [thread:$0]  %s19, 128, %s21, [#allocation3]
    $region5: #{tpu_custom_call.1} parent=1 // pred_fallthru
      _
    // Predicated region
    $region6: #{tpu_custom_call.1} parent=1 // pred_check
      _
    $region7: #{tpu_custom_call.1} parent=1 // pred_check_branch
      %25 = sbr.rel (0) target = $region9
    $region8: #{tpu_custom_call.1} parent=1 // pred_region
      %27 = vsyncadd [#allocation6], 0
      %s28 = sshll.u32 %s1, 4
      %s29 = int_to_ptr.hbm [resolvable:$true] %s28
      %s30 = sshll.u32 [#allocation5], 4
      %s31 = int_to_ptr.vmem [resolvable:$true] %s30
      %36 = dma.hbm_to_vmem [thread:$0]  %s29, 1024, %s31, [#allocation6], 128, 128, 8
    $region9: #{tpu_custom_call.1} parent=1 // pred_fallthru
      _
    // Predicated region
    $region10: #{tpu_custom_call.1} parent=1 // pred_check
      _
    $region11: #{tpu_custom_call.1} parent=1 // pred_check_branch
      %38 = sbr.rel (0) target = $region13
    $region12: #{tpu_custom_call.1} parent=1 // pred_region
      _
    $region13: #{tpu_custom_call.1} parent=1 // pred_fallthru
      _
    // Predicated region
    $region14: #{tpu_custom_call.1} parent=1 // pred_check
      _
    $region15: #{tpu_custom_call.1} parent=1 // pred_check_branch
      %40 = sbr.rel (0) target = $region17
    $region16: #{tpu_custom_call.1} parent=1 // pred_region
      %42 = vsyncadd [#allocation6], 0
      %s43 = sshll.u32 %s3, 4
      %s44 = int_to_ptr.hbm [resolvable:$true] %s43
      %s45 = sshll.u32 [#allocation7], 4
      %s46 = int_to_ptr.vmem [resolvable:$true] %s45
      %51 = dma.hbm_to_vmem [thread:$0]  %s44, 2048, %s46, [#allocation6], 128, 128, 8
    $region17: #{tpu_custom_call.1} parent=1 // pred_fallthru
      _
    // Predicated region
    $region18: #{tpu_custom_call.1} parent=1 // pred_check
      _
    $region19: #{tpu_custom_call.1} parent=1 // pred_check_branch
      %53 = sbr.rel (0) target = $region21
    $region20: #{tpu_custom_call.1} parent=1 // pred_region
      _
    $region21: #{tpu_custom_call.1} parent=1 // pred_fallthru
      _
    // Predicated region
    $region22: #{tpu_custom_call.1} parent=1 // pred_check
      _
    $region23: #{tpu_custom_call.1} parent=1 // pred_check_branch
      %55 = sbr.rel (0) target = $region25
    $region24: #{tpu_custom_call.1} parent=1 // pred_region
      %57 = dma.done [#allocation3], 128
    $region25: #{tpu_custom_call.1} parent=1 // pred_fallthru
      _
    // Predicated region
    $region26: #{tpu_custom_call.1} parent=1 // pred_check
      _
    $region27: #{tpu_custom_call.1} parent=1 // pred_check_branch
      %59 = sbr.rel (0) target = $region29
    $region28: #{tpu_custom_call.1} parent=1 // pred_region
      %61 = dma.done [#allocation6], 1024
    $region29: #{tpu_custom_call.1} parent=1 // pred_fallthru
      _
    // Predicated region
    $region30: #{tpu_custom_call.1} parent=1 // pred_check
      _
    $region31: #{tpu_custom_call.1} parent=1 // pred_check_branch
      %63 = sbr.rel (0) target = $region33
    $region32: #{tpu_custom_call.1} parent=1 // pred_region
      %65 = dma.done [#allocation6], 2048
    $region33: #{tpu_custom_call.1} parent=1 // pred_fallthru
      _
    %v66 = vld [vmem:[#allocation2] sm:$0xff]
    %v67 = vld [vmem:[#allocation5] sm:$0xff]
    %v68 = vld [vmem:[#allocation5 + $0x8] sm:$0xff]
    %v69 = vld [vmem:[#allocation5 + $0x10] sm:$0xff]
    %v70 = vld [vmem:[#allocation5 + $0x18] sm:$0xff]
    %v71 = vld [vmem:[#allocation5 + $0x20] sm:$0xff]
    %v72 = vld [vmem:[#allocation5 + $0x28] sm:$0xff]
    %v73 = vld [vmem:[#allocation5 + $0x30] sm:$0xff]
    %v74 = vld [vmem:[#allocation5 + $0x38] sm:$0xff]
    %v75 = vld [vmem:[%s2] sm:$0x1]
    %v77 = vperm.slane %v75, 0
    %vm79 = vcmask 523264
    %v81 = vsel %vm79, %v66, 0
    %83 = vmatpush.msra.mxu0 0.0
    %84 = vmatpush.msra.mxu0 0.0
    %85 = vmatpush.msra.mxu0 0.0
    %86 = vmatpush.msra.mxu0 0.0
    %87 = vmatpush.msra.mxu0 0.0
    %88 = vmatpush.msra.mxu0 0.0
    %89 = vmatpush.msra.mxu0 0.0
    %90 = vmatpush.msra.mxu0 0.0
    %v91 = vand.u32 %v74, 4294901760
    %92 = vmatpush.msra.mxu0 %v91
    %v93 = vand.u32 %v73, 4294901760
    %94 = vmatpush.msra.mxu0 %v93
    %v95 = vand.u32 %v72, 4294901760
    %96 = vmatpush.msra.mxu0 %v95
    %v97 = vand.u32 %v71, 4294901760
    %98 = vmatpush.msra.mxu0 %v97
    %v99 = vand.u32 %v70, 4294901760
    %100 = vmatpush.msra.mxu0 %v99
    %v101 = vand.u32 %v69, 4294901760
    %102 = vmatpush.msra.mxu0 %v101
    %v103 = vand.u32 %v68, 4294901760
    %104 = vmatpush.msra.mxu0 %v103
    %v105 = vand.u32 %v67, 4294901760
    %106 = vmatpush.msra.mxu0 %v105
    %v107 = vand.u32 %v81, 4294901760
    %v108 = vsub.f32 %v81, %v107
    %v109 = vand.u32 %v108, 4294901760
    %v110 = vsub.f32 %v108, %v109
    %v111 = vand.u32 %v110, 4294901760
    %112 = vmatmul.f32.gmra.mxu0 %v111
    %v113 = vpop.f32.mrf.mxu0
    %v114 = vadd.f32 %v77, %v113
    %115 = vdwg.mxu0
    %116 = vmatpush.msra.mxu0 0.0
    %117 = vmatpush.msra.mxu0 0.0
    %118 = vmatpush.msra.mxu0 0.0
    %119 = vmatpush.msra.mxu0 0.0
    %120 = vmatpush.msra.mxu0 0.0
    %121 = vmatpush.msra.mxu0 0.0
    %122 = vmatpush.msra.mxu0 0.0
    %123 = vmatpush.msra.mxu0 0.0
    %v124 = vand.u32 %v74, 4294901760
    %v125 = vsub.f32 %v74, %v124
    %v126 = vand.u32 %v125, 4294901760
    %v127 = vsub.f32 %v125, %v126
    %v128 = vand.u32 %v127, 4294901760
    %129 = vmatpush.msra.mxu0 %v128
    %v130 = vand.u32 %v73, 4294901760
    %v131 = vsub.f32 %v73, %v130
    %v132 = vand.u32 %v131, 4294901760
    %v133 = vsub.f32 %v131, %v132
    %v134 = vand.u32 %v133, 4294901760
    %135 = vmatpush.msra.mxu0 %v134
    %v136 = vand.u32 %v72, 4294901760
    %v137 = vsub.f32 %v72, %v136
    %v138 = vand.u32 %v137, 4294901760
    %v139 = vsub.f32 %v137, %v138
    %v140 = vand.u32 %v139, 4294901760
    %141 = vmatpush.msra.mxu0 %v140
    %v142 = vand.u32 %v71, 4294901760
    %v143 = vsub.f32 %v71, %v142
    %v144 = vand.u32 %v143, 4294901760
    %v145 = vsub.f32 %v143, %v144
    %v146 = vand.u32 %v145, 4294901760
    %147 = vmatpush.msra.mxu0 %v146
    %v148 = vand.u32 %v70, 4294901760
    %v149 = vsub.f32 %v70, %v148
    %v150 = vand.u32 %v149, 4294901760
    %v151 = vsub.f32 %v149, %v150
    %v152 = vand.u32 %v151, 4294901760
    %153 = vmatpush.msra.mxu0 %v152
    %v154 = vand.u32 %v69, 4294901760
    %v155 = vsub.f32 %v69, %v154
    %v156 = vand.u32 %v155, 4294901760
    %v157 = vsub.f32 %v155, %v156
    %v158 = vand.u32 %v157, 4294901760
    %159 = vmatpush.msra.mxu0 %v158
    %v160 = vand.u32 %v68, 4294901760
    %v161 = vsub.f32 %v68, %v160
    %v162 = vand.u32 %v161, 4294901760
    %v163 = vsub.f32 %v161, %v162
    %v164 = vand.u32 %v163, 4294901760
    %165 = vmatpush.msra.mxu0 %v164
    %v166 = vand.u32 %v67, 4294901760
    %v167 = vsub.f32 %v67, %v166
    %v168 = vand.u32 %v167, 4294901760
    %v169 = vsub.f32 %v167, %v168
    %v170 = vand.u32 %v169, 4294901760
    %171 = vmatpush.msra.mxu0 %v170
    %v172 = vand.u32 %v81, 4294901760
    %173 = vmatmul.f32.gmra.mxu0 %v172
    %v174 = vpop.f32.mrf.mxu0
    %v175 = vadd.f32 %v114, %v174
    %176 = vdwg.mxu0
    %177 = vmatpush.msra.mxu0 0.0
    %178 = vmatpush.msra.mxu0 0.0
    %179 = vmatpush.msra.mxu0 0.0
    %180 = vmatpush.msra.mxu0 0.0
    %181 = vmatpush.msra.mxu0 0.0
    %182 = vmatpush.msra.mxu0 0.0
    %183 = vmatpush.msra.mxu0 0.0
    %184 = vmatpush.msra.mxu0 0.0
    %v185 = vand.u32 %v74, 4294901760
    %v186 = vsub.f32 %v74, %v185
    %187 = vmatpush.msra.mxu0 %v186
    %v188 = vand.u32 %v73, 4294901760
    %v189 = vsub.f32 %v73, %v188
    %190 = vmatpush.msra.mxu0 %v189
    %v191 = vand.u32 %v72, 4294901760
    %v192 = vsub.f32 %v72, %v191
    %193 = vmatpush.msra.mxu0 %v192
    %v194 = vand.u32 %v71, 4294901760
    %v195 = vsub.f32 %v71, %v194
    %196 = vmatpush.msra.mxu0 %v195
    %v197 = vand.u32 %v70, 4294901760
    %v198 = vsub.f32 %v70, %v197
    %199 = vmatpush.msra.mxu0 %v198
    %v200 = vand.u32 %v69, 4294901760
    %v201 = vsub.f32 %v69, %v200
    %202 = vmatpush.msra.mxu0 %v201
    %v203 = vand.u32 %v68, 4294901760
    %v204 = vsub.f32 %v68, %v203
    %205 = vmatpush.msra.mxu0 %v204
    %v206 = vand.u32 %v67, 4294901760
    %v207 = vsub.f32 %v67, %v206
    %208 = vmatpush.msra.mxu0 %v207
    %v209 = vand.u32 %v81, 4294901760
    %v210 = vsub.f32 %v81, %v209
    %211 = vmatmul.f32.gmra.mxu0 %v210
    %v212 = vpop.f32.mrf.mxu0
    %v213 = vadd.f32 %v175, %v212
    %214 = vdwg.mxu0
    %215 = vmatpush.msra.mxu0 0.0
    %216 = vmatpush.msra.mxu0 0.0
    %217 = vmatpush.msra.mxu0 0.0
    %218 = vmatpush.msra.mxu0 0.0
    %219 = vmatpush.msra.mxu0 0.0
    %220 = vmatpush.msra.mxu0 0.0
    %221 = vmatpush.msra.mxu0 0.0
    %222 = vmatpush.msra.mxu0 0.0
    %v223 = vand.u32 %v74, 4294901760
    %224 = vmatpush.msra.mxu0 %v223
    %v225 = vand.u32 %v73, 4294901760
    %226 = vmatpush.msra.mxu0 %v225
    %v227 = vand.u32 %v72, 4294901760
    %228 = vmatpush.msra.mxu0 %v227
    %v229 = vand.u32 %v71, 4294901760
    %230 = vmatpush.msra.mxu0 %v229
    %v231 = vand.u32 %v70, 4294901760
    %232 = vmatpush.msra.mxu0 %v231
    %v233 = vand.u32 %v69, 4294901760
    %234 = vmatpush.msra.mxu0 %v233
    %v235 = vand.u32 %v68, 4294901760
    %236 = vmatpush.msra.mxu0 %v235
    %v237 = vand.u32 %v67, 4294901760
    %238 = vmatpush.msra.mxu0 %v237
    %v239 = vand.u32 %v81, 4294901760
    %v240 = vsub.f32 %v81, %v239
    %v241 = vand.u32 %v240, 4294901760
    %242 = vmatmul.f32.gmra.mxu0 %v241
    %v243 = vpop.f32.mrf.mxu0
    %v244 = vadd.f32 %v213, %v243
    %245 = vdwg.mxu0
    %246 = vmatpush.msra.mxu0 0.0
    %247 = vmatpush.msra.mxu0 0.0
    %248 = vmatpush.msra.mxu0 0.0
    %249 = vmatpush.msra.mxu0 0.0
    %250 = vmatpush.msra.mxu0 0.0
    %251 = vmatpush.msra.mxu0 0.0
    %252 = vmatpush.msra.mxu0 0.0
    %253 = vmatpush.msra.mxu0 0.0
    %v254 = vand.u32 %v74, 4294901760
    %v255 = vsub.f32 %v74, %v254
    %v256 = vand.u32 %v255, 4294901760
    %257 = vmatpush.msra.mxu0 %v256
    %v258 = vand.u32 %v73, 4294901760
    %v259 = vsub.f32 %v73, %v258
    %v260 = vand.u32 %v259, 4294901760
    %261 = vmatpush.msra.mxu0 %v260
    %v262 = vand.u32 %v72, 4294901760
    %v263 = vsub.f32 %v72, %v262
    %v264 = vand.u32 %v263, 4294901760
    %265 = vmatpush.msra.mxu0 %v264
    %v266 = vand.u32 %v71, 4294901760
    %v267 = vsub.f32 %v71, %v266
    %v268 = vand.u32 %v267, 4294901760
    %269 = vmatpush.msra.mxu0 %v268
    %v270 = vand.u32 %v70, 4294901760
    %v271 = vsub.f32 %v70, %v270
    %v272 = vand.u32 %v271, 4294901760
    %273 = vmatpush.msra.mxu0 %v272
    %v274 = vand.u32 %v69, 4294901760
    %v275 = vsub.f32 %v69, %v274
    %v276 = vand.u32 %v275, 4294901760
    %277 = vmatpush.msra.mxu0 %v276
    %v278 = vand.u32 %v68, 4294901760
    %v279 = vsub.f32 %v68, %v278
    %v280 = vand.u32 %v279, 4294901760
    %281 = vmatpush.msra.mxu0 %v280
    %v282 = vand.u32 %v67, 4294901760
    %v283 = vsub.f32 %v67, %v282
    %v284 = vand.u32 %v283, 4294901760
    %285 = vmatpush.msra.mxu0 %v284
    %v286 = vand.u32 %v81, 4294901760
    %287 = vmatmul.f32.gmra.mxu0 %v286
    %v288 = vpop.f32.mrf.mxu0
    %v289 = vadd.f32 %v244, %v288
    %290 = vdwg.mxu0
    %291 = vmatpush.msra.mxu0 0.0
    %292 = vmatpush.msra.mxu0 0.0
    %293 = vmatpush.msra.mxu0 0.0
    %294 = vmatpush.msra.mxu0 0.0
    %295 = vmatpush.msra.mxu0 0.0
    %296 = vmatpush.msra.mxu0 0.0
    %297 = vmatpush.msra.mxu0 0.0
    %298 = vmatpush.msra.mxu0 0.0
    %v299 = vand.u32 %v74, 4294901760
    %300 = vmatpush.msra.mxu0 %v299
    %v301 = vand.u32 %v73, 4294901760
    %302 = vmatpush.msra.mxu0 %v301
    %v303 = vand.u32 %v72, 4294901760
    %304 = vmatpush.msra.mxu0 %v303
    %v305 = vand.u32 %v71, 4294901760
    %306 = vmatpush.msra.mxu0 %v305
    %v307 = vand.u32 %v70, 4294901760
    %308 = vmatpush.msra.mxu0 %v307
    %v309 = vand.u32 %v69, 4294901760
    %310 = vmatpush.msra.mxu0 %v309
    %v311 = vand.u32 %v68, 4294901760
    %312 = vmatpush.msra.mxu0 %v311
    %v313 = vand.u32 %v67, 4294901760
    %314 = vmatpush.msra.mxu0 %v313
    %v315 = vand.u32 %v81, 4294901760
    %316 = vmatmul.f32.gmra.mxu0 %v315
    %v317 = vpop.f32.mrf.mxu0
    %v318 = vadd.f32 %v289, %v317
    %319 = vdwg.mxu0
    %v320 = vmax.f32 %v318, 0.0
    %v321 = vld [vmem:[#allocation7] sm:$0xff]
    %v322 = vld [vmem:[#allocation7 + $0x8] sm:$0xff]
    %v323 = vld [vmem:[#allocation7 + $0x10] sm:$0xff]
    %v324 = vld [vmem:[#allocation7 + $0x18] sm:$0xff]
    %v325 = vld [vmem:[#allocation7 + $0x20] sm:$0xff]
    %v326 = vld [vmem:[#allocation7 + $0x28] sm:$0xff]
    %v327 = vld [vmem:[#allocation7 + $0x30] sm:$0xff]
    %v328 = vld [vmem:[#allocation7 + $0x38] sm:$0xff]
    %v329 = vld [vmem:[#allocation7 + $0x40] sm:$0xff]
    %v330 = vld [vmem:[#allocation7 + $0x48] sm:$0xff]
    %v331 = vld [vmem:[#allocation7 + $0x50] sm:$0xff]
    %v332 = vld [vmem:[#allocation7 + $0x58] sm:$0xff]
    %v333 = vld [vmem:[#allocation7 + $0x60] sm:$0xff]
    %v334 = vld [vmem:[#allocation7 + $0x68] sm:$0xff]
    %v335 = vld [vmem:[#allocation7 + $0x70] sm:$0xff]
    %v336 = vld [vmem:[#allocation7 + $0x78] sm:$0xff]
    %v337 = vld [vmem:[%s4] sm:$0x1]
    %v339 = vperm.slane %v337, 0
    %v341 = vand.u32 %v336, 4294901760
    %342 = vmatpush.msra.mxu0 %v341
    %v343 = vand.u32 %v335, 4294901760
    %344 = vmatpush.msra.mxu0 %v343
    %v345 = vand.u32 %v334, 4294901760
    %346 = vmatpush.msra.mxu0 %v345
    %v347 = vand.u32 %v333, 4294901760
    %348 = vmatpush.msra.mxu0 %v347
    %v349 = vand.u32 %v332, 4294901760
    %350 = vmatpush.msra.mxu0 %v349
    %v351 = vand.u32 %v331, 4294901760
    %352 = vmatpush.msra.mxu0 %v351
    %v353 = vand.u32 %v330, 4294901760
    %354 = vmatpush.msra.mxu0 %v353
    %v355 = vand.u32 %v329, 4294901760
    %356 = vmatpush.msra.mxu0 %v355
    %v357 = vand.u32 %v328, 4294901760
    %358 = vmatpush.msra.mxu0 %v357
    %v359 = vand.u32 %v327, 4294901760
    %360 = vmatpush.msra.mxu0 %v359
    %v361 = vand.u32 %v326, 4294901760
    %362 = vmatpush.msra.mxu0 %v361
    %v363 = vand.u32 %v325, 4294901760
    %364 = vmatpush.msra.mxu0 %v363
    %v365 = vand.u32 %v324, 4294901760
    %366 = vmatpush.msra.mxu0 %v365
    %v367 = vand.u32 %v323, 4294901760
    %368 = vmatpush.msra.mxu0 %v367
    %v369 = vand.u32 %v322, 4294901760
    %370 = vmatpush.msra.mxu0 %v369
    %v371 = vand.u32 %v321, 4294901760
    %372 = vmatpush.msra.mxu0 %v371
    %v373 = vand.u32 %v320, 4294901760
    %v374 = vsub.f32 %v320, %v373
    %v375 = vand.u32 %v374, 4294901760
    %v376 = vsub.f32 %v374, %v375
    %v377 = vand.u32 %v376, 4294901760
    %378 = vmatmul.f32.gmra.mxu0 %v377
    %v379 = vpop.f32.mrf.mxu0
    %v380 = vadd.f32 %v339, %v379
    %381 = vdwg.mxu0
    %v382 = vand.u32 %v336, 4294901760
    %v383 = vsub.f32 %v336, %v382
    %v384 = vand.u32 %v383, 4294901760
    %v385 = vsub.f32 %v383, %v384
    %v386 = vand.u32 %v385, 4294901760
    %387 = vmatpush.msra.mxu0 %v386
    %v388 = vand.u32 %v335, 4294901760
    %v389 = vsub.f32 %v335, %v388
    %v390 = vand.u32 %v389, 4294901760
    %v391 = vsub.f32 %v389, %v390
    %v392 = vand.u32 %v391, 4294901760
    %393 = vmatpush.msra.mxu0 %v392
    %v394 = vand.u32 %v334, 4294901760
    %v395 = vsub.f32 %v334, %v394
    %v396 = vand.u32 %v395, 4294901760
    %v397 = vsub.f32 %v395, %v396
    %v398 = vand.u32 %v397, 4294901760
    %399 = vmatpush.msra.mxu0 %v398
    %v400 = vand.u32 %v333, 4294901760
    %v401 = vsub.f32 %v333, %v400
    %v402 = vand.u32 %v401, 4294901760
    %v403 = vsub.f32 %v401, %v402
    %v404 = vand.u32 %v403, 4294901760
    %405 = vmatpush.msra.mxu0 %v404
    %v406 = vand.u32 %v332, 4294901760
    %v407 = vsub.f32 %v332, %v406
    %v408 = vand.u32 %v407, 4294901760
    %v409 = vsub.f32 %v407, %v408
    %v410 = vand.u32 %v409, 4294901760
    %411 = vmatpush.msra.mxu0 %v410
    %v412 = vand.u32 %v331, 4294901760
    %v413 = vsub.f32 %v331, %v412
    %v414 = vand.u32 %v413, 4294901760
    %v415 = vsub.f32 %v413, %v414
    %v416 = vand.u32 %v415, 4294901760
    %417 = vmatpush.msra.mxu0 %v416
    %v418 = vand.u32 %v330, 4294901760
    %v419 = vsub.f32 %v330, %v418
    %v420 = vand.u32 %v419, 4294901760
    %v421 = vsub.f32 %v419, %v420
    %v422 = vand.u32 %v421, 4294901760
    %423 = vmatpush.msra.mxu0 %v422
    %v424 = vand.u32 %v329, 4294901760
    %v425 = vsub.f32 %v329, %v424
    %v426 = vand.u32 %v425, 4294901760
    %v427 = vsub.f32 %v425, %v426
    %v428 = vand.u32 %v427, 4294901760
    %429 = vmatpush.msra.mxu0 %v428
    %v430 = vand.u32 %v328, 4294901760
    %v431 = vsub.f32 %v328, %v430
    %v432 = vand.u32 %v431, 4294901760
    %v433 = vsub.f32 %v431, %v432
    %v434 = vand.u32 %v433, 4294901760
    %435 = vmatpush.msra.mxu0 %v434
    %v436 = vand.u32 %v327, 4294901760
    %v437 = vsub.f32 %v327, %v436
    %v438 = vand.u32 %v437, 4294901760
    %v439 = vsub.f32 %v437, %v438
    %v440 = vand.u32 %v439, 4294901760
    %441 = vmatpush.msra.mxu0 %v440
    %v442 = vand.u32 %v326, 4294901760
    %v443 = vsub.f32 %v326, %v442
    %v444 = vand.u32 %v443, 4294901760
    %v445 = vsub.f32 %v443, %v444
    %v446 = vand.u32 %v445, 4294901760
    %447 = vmatpush.msra.mxu0 %v446
    %v448 = vand.u32 %v325, 4294901760
    %v449 = vsub.f32 %v325, %v448
    %v450 = vand.u32 %v449, 4294901760
    %v451 = vsub.f32 %v449, %v450
    %v452 = vand.u32 %v451, 4294901760
    %453 = vmatpush.msra.mxu0 %v452
    %v454 = vand.u32 %v324, 4294901760
    %v455 = vsub.f32 %v324, %v454
    %v456 = vand.u32 %v455, 4294901760
    %v457 = vsub.f32 %v455, %v456
    %v458 = vand.u32 %v457, 4294901760
    %459 = vmatpush.msra.mxu0 %v458
    %v460 = vand.u32 %v323, 4294901760
    %v461 = vsub.f32 %v323, %v460
    %v462 = vand.u32 %v461, 4294901760
    %v463 = vsub.f32 %v461, %v462
    %v464 = vand.u32 %v463, 4294901760
    %465 = vmatpush.msra.mxu0 %v464
    %v466 = vand.u32 %v322, 4294901760
    %v467 = vsub.f32 %v322, %v466
    %v468 = vand.u32 %v467, 4294901760
    %v469 = vsub.f32 %v467, %v468
    %v470 = vand.u32 %v469, 4294901760
    %471 = vmatpush.msra.mxu0 %v470
    %v472 = vand.u32 %v321, 4294901760
    %v473 = vsub.f32 %v321, %v472
    %v474 = vand.u32 %v473, 4294901760
    %v475 = vsub.f32 %v473, %v474
    %v476 = vand.u32 %v475, 4294901760
    %477 = vmatpush.msra.mxu0 %v476
    %v478 = vand.u32 %v320, 4294901760
    %479 = vmatmul.f32.gmra.mxu0 %v478
    %v480 = vpop.f32.mrf.mxu0
    %v481 = vadd.f32 %v380, %v480
    %482 = vdwg.mxu0
    %v483 = vand.u32 %v336, 4294901760
    %v484 = vsub.f32 %v336, %v483
    %485 = vmatpush.msra.mxu0 %v484
    %v486 = vand.u32 %v335, 4294901760
    %v487 = vsub.f32 %v335, %v486
    %488 = vmatpush.msra.mxu0 %v487
    %v489 = vand.u32 %v334, 4294901760
    %v490 = vsub.f32 %v334, %v489
    %491 = vmatpush.msra.mxu0 %v490
    %v492 = vand.u32 %v333, 4294901760
    %v493 = vsub.f32 %v333, %v492
    %494 = vmatpush.msra.mxu0 %v493
    %v495 = vand.u32 %v332, 4294901760
    %v496 = vsub.f32 %v332, %v495
    %497 = vmatpush.msra.mxu0 %v496
    %v498 = vand.u32 %v331, 4294901760
    %v499 = vsub.f32 %v331, %v498
    %500 = vmatpush.msra.mxu0 %v499
    %v501 = vand.u32 %v330, 4294901760
    %v502 = vsub.f32 %v330, %v501
    %503 = vmatpush.msra.mxu0 %v502
    %v504 = vand.u32 %v329, 4294901760
    %v505 = vsub.f32 %v329, %v504
    %506 = vmatpush.msra.mxu0 %v505
    %v507 = vand.u32 %v328, 4294901760
    %v508 = vsub.f32 %v328, %v507
    %509 = vmatpush.msra.mxu0 %v508
    %v510 = vand.u32 %v327, 4294901760
    %v511 = vsub.f32 %v327, %v510
    %512 = vmatpush.msra.mxu0 %v511
    %v513 = vand.u32 %v326, 4294901760
    %v514 = vsub.f32 %v326, %v513
    %515 = vmatpush.msra.mxu0 %v514
    %v516 = vand.u32 %v325, 4294901760
    %v517 = vsub.f32 %v325, %v516
    %518 = vmatpush.msra.mxu0 %v517
    %v519 = vand.u32 %v324, 4294901760
    %v520 = vsub.f32 %v324, %v519
    %521 = vmatpush.msra.mxu0 %v520
    %v522 = vand.u32 %v323, 4294901760
    %v523 = vsub.f32 %v323, %v522
    %524 = vmatpush.msra.mxu0 %v523
    %v525 = vand.u32 %v322, 4294901760
    %v526 = vsub.f32 %v322, %v525
    %527 = vmatpush.msra.mxu0 %v526
    %v528 = vand.u32 %v321, 4294901760
    %v529 = vsub.f32 %v321, %v528
    %530 = vmatpush.msra.mxu0 %v529
    %v531 = vand.u32 %v320, 4294901760
    %v532 = vsub.f32 %v320, %v531
    %533 = vmatmul.f32.gmra.mxu0 %v532
    %v534 = vpop.f32.mrf.mxu0
    %v535 = vadd.f32 %v481, %v534
    %536 = vdwg.mxu0
    %v537 = vand.u32 %v336, 4294901760
    %538 = vmatpush.msra.mxu0 %v537
    %v539 = vand.u32 %v335, 4294901760
    %540 = vmatpush.msra.mxu0 %v539
    %v541 = vand.u32 %v334, 4294901760
    %542 = vmatpush.msra.mxu0 %v541
    %v543 = vand.u32 %v333, 4294901760
    %544 = vmatpush.msra.mxu0 %v543
    %v545 = vand.u32 %v332, 4294901760
    %546 = vmatpush.msra.mxu0 %v545
    %v547 = vand.u32 %v331, 4294901760
    %548 = vmatpush.msra.mxu0 %v547
    %v549 = vand.u32 %v330, 4294901760
    %550 = vmatpush.msra.mxu0 %v549
    %v551 = vand.u32 %v329, 4294901760
    %552 = vmatpush.msra.mxu0 %v551
    %v553 = vand.u32 %v328, 4294901760
    %554 = vmatpush.msra.mxu0 %v553
    %v555 = vand.u32 %v327, 4294901760
    %556 = vmatpush.msra.mxu0 %v555
    %v557 = vand.u32 %v326, 4294901760
    %558 = vmatpush.msra.mxu0 %v557
    %v559 = vand.u32 %v325, 4294901760
    %560 = vmatpush.msra.mxu0 %v559
    %v561 = vand.u32 %v324, 4294901760
    %562 = vmatpush.msra.mxu0 %v561
    %v563 = vand.u32 %v323, 4294901760
    %564 = vmatpush.msra.mxu0 %v563
    %v565 = vand.u32 %v322, 4294901760
    %566 = vmatpush.msra.mxu0 %v565
    %v567 = vand.u32 %v321, 4294901760
    %568 = vmatpush.msra.mxu0 %v567
    %v569 = vand.u32 %v320, 4294901760
    %v570 = vsub.f32 %v320, %v569
    %v571 = vand.u32 %v570, 4294901760
    %572 = vmatmul.f32.gmra.mxu0 %v571
    %v573 = vpop.f32.mrf.mxu0
    %v574 = vadd.f32 %v535, %v573
    %575 = vdwg.mxu0
    %v576 = vand.u32 %v336, 4294901760
    %v577 = vsub.f32 %v336, %v576
    %v578 = vand.u32 %v577, 4294901760
    %579 = vmatpush.msra.mxu0 %v578
    %v580 = vand.u32 %v335, 4294901760
    %v581 = vsub.f32 %v335, %v580
    %v582 = vand.u32 %v581, 4294901760
    %583 = vmatpush.msra.mxu0 %v582
    %v584 = vand.u32 %v334, 4294901760
    %v585 = vsub.f32 %v334, %v584
    %v586 = vand.u32 %v585, 4294901760
    %587 = vmatpush.msra.mxu0 %v586
    %v588 = vand.u32 %v333, 4294901760
    %v589 = vsub.f32 %v333, %v588
    %v590 = vand.u32 %v589, 4294901760
    %591 = vmatpush.msra.mxu0 %v590
    %v592 = vand.u32 %v332, 4294901760
    %v593 = vsub.f32 %v332, %v592
    %v594 = vand.u32 %v593, 4294901760
    %595 = vmatpush.msra.mxu0 %v594
    %v596 = vand.u32 %v331, 4294901760
    %v597 = vsub.f32 %v331, %v596
    %v598 = vand.u32 %v597, 4294901760
    %599 = vmatpush.msra.mxu0 %v598
    %v600 = vand.u32 %v330, 4294901760
    %v601 = vsub.f32 %v330, %v600
    %v602 = vand.u32 %v601, 4294901760
    %603 = vmatpush.msra.mxu0 %v602
    %v604 = vand.u32 %v329, 4294901760
    %v605 = vsub.f32 %v329, %v604
    %v606 = vand.u32 %v605, 4294901760
    %607 = vmatpush.msra.mxu0 %v606
    %v608 = vand.u32 %v328, 4294901760
    %v609 = vsub.f32 %v328, %v608
    %v610 = vand.u32 %v609, 4294901760
    %611 = vmatpush.msra.mxu0 %v610
    %v612 = vand.u32 %v327, 4294901760
    %v613 = vsub.f32 %v327, %v612
    %v614 = vand.u32 %v613, 4294901760
    %615 = vmatpush.msra.mxu0 %v614
    %v616 = vand.u32 %v326, 4294901760
    %v617 = vsub.f32 %v326, %v616
    %v618 = vand.u32 %v617, 4294901760
    %619 = vmatpush.msra.mxu0 %v618
    %v620 = vand.u32 %v325, 4294901760
    %v621 = vsub.f32 %v325, %v620
    %v622 = vand.u32 %v621, 4294901760
    %623 = vmatpush.msra.mxu0 %v622
    %v624 = vand.u32 %v324, 4294901760
    %v625 = vsub.f32 %v324, %v624
    %v626 = vand.u32 %v625, 4294901760
    %627 = vmatpush.msra.mxu0 %v626
    %v628 = vand.u32 %v323, 4294901760
    %v629 = vsub.f32 %v323, %v628
    %v630 = vand.u32 %v629, 4294901760
    %631 = vmatpush.msra.mxu0 %v630
    %v632 = vand.u32 %v322, 4294901760
    %v633 = vsub.f32 %v322, %v632
    %v634 = vand.u32 %v633, 4294901760
    %635 = vmatpush.msra.mxu0 %v634
    %v636 = vand.u32 %v321, 4294901760
    %v637 = vsub.f32 %v321, %v636
    %v638 = vand.u32 %v637, 4294901760
    %639 = vmatpush.msra.mxu0 %v638
    %v640 = vand.u32 %v320, 4294901760
    %641 = vmatmul.f32.gmra.mxu0 %v640
    %v642 = vpop.f32.mrf.mxu0
    %v643 = vadd.f32 %v574, %v642
    %644 = vdwg.mxu0
    %v645 = vand.u32 %v336, 4294901760
    %646 = vmatpush.msra.mxu0 %v645
    %v647 = vand.u32 %v335, 4294901760
    %648 = vmatpush.msra.mxu0 %v647
    %v649 = vand.u32 %v334, 4294901760
    %650 = vmatpush.msra.mxu0 %v649
    %v651 = vand.u32 %v333, 4294901760
    %652 = vmatpush.msra.mxu0 %v651
    %v653 = vand.u32 %v332, 4294901760
    %654 = vmatpush.msra.mxu0 %v653
    %v655 = vand.u32 %v331, 4294901760
    %656 = vmatpush.msra.mxu0 %v655
    %v657 = vand.u32 %v330, 4294901760
    %658 = vmatpush.msra.mxu0 %v657
    %v659 = vand.u32 %v329, 4294901760
    %660 = vmatpush.msra.mxu0 %v659
    %v661 = vand.u32 %v328, 4294901760
    %662 = vmatpush.msra.mxu0 %v661
    %v663 = vand.u32 %v327, 4294901760
    %664 = vmatpush.msra.mxu0 %v663
    %v665 = vand.u32 %v326, 4294901760
    %666 = vmatpush.msra.mxu0 %v665
    %v667 = vand.u32 %v325, 4294901760
    %668 = vmatpush.msra.mxu0 %v667
    %v669 = vand.u32 %v324, 4294901760
    %670 = vmatpush.msra.mxu0 %v669
    %v671 = vand.u32 %v323, 4294901760
    %672 = vmatpush.msra.mxu0 %v671
    %v673 = vand.u32 %v322, 4294901760
    %674 = vmatpush.msra.mxu0 %v673
    %v675 = vand.u32 %v321, 4294901760
    %676 = vmatpush.msra.mxu0 %v675
    %v677 = vand.u32 %v320, 4294901760
    %678 = vmatmul.f32.gmra.mxu0 %v677
    %v679 = vpop.f32.mrf.mxu0
    %v680 = vadd.f32 %v643, %v679
    %681 = vdwg.mxu0
    %682 = vst [vmem:[#allocation8] sm:$0xff] %v680
    // Predicated region
    $region34: #{tpu_custom_call.1} parent=1 // pred_check
      _
    $region35: #{tpu_custom_call.1} parent=1 // pred_check_branch
      %684 = sbr.rel (0) target = $region37
    $region36: #{tpu_custom_call.1} parent=1 // pred_region
      %686 = vsyncadd [#allocation4], 0
      %s688 = sshll.u32 [#allocation8], 4
      %s689 = int_to_ptr.vmem [resolvable:$true] %s688
      %s690 = sshll.u32 %s5, 4
      %s691 = int_to_ptr.hbm [resolvable:$true] %s690
      %693 = dma.vmem_to_hbm [thread:$0]  %s689, 128, %s691, [#allocation4]
    $region37: #{tpu_custom_call.1} parent=1 // pred_fallthru
      _
    // Predicated region
    $region38: #{tpu_custom_call.1} parent=1 // pred_check
      _
    $region39: #{tpu_custom_call.1} parent=1 // pred_check_branch
      %695 = sbr.rel (0) target = $region41
    $region40: #{tpu_custom_call.1} parent=1 // pred_region
      %697 = dma.done [#allocation4], 128
    $region41: #{tpu_custom_call.1} parent=1 // pred_fallthru
      _
    %698 = vsyncpa [#allocation3], 1
    %699 = vsyncpa [#allocation6], 1
    %700 = vsyncpa [#allocation4], 1

</llo_original>
